<compile_context>
chip_gen: v6e
topology: v6e:2x2x1
jax: 0.10.0
libtpu: 0.0.40
codegen_flags: <defaults>
</compile_context>

<pallas_src>
import functools

import jax
import jax.numpy as jnp
from jax.experimental import pallas as pl
from jax.experimental.pallas import tpu as pltpu


def _round_up(v, m):
    return ((v + m - 1) // m) * m


def _trunk_kernel(x_ref, e1_ref, e2_ref,
                  w1_ref, b1_ref, w2_ref, b2_ref,
                  w3_ref, b3_ref, w4_ref, b4_ref,
                  o_ref, *, matmul_dtype):
    f32 = jnp.float32

    e1 = e1_ref[...].astype(f32)
    e2 = e2_ref[...].astype(f32)
    # h*e1 + (1-h)*e2 == e2 + h*(e1-e2); hoist the difference once per tile.
    d = e1 - e2

    # ---- layer 1: K = input_dim (tiny) -> unrolled VPU FMAs in f32 ----------
    d_in = w1_ref.shape[0]
    x = x_ref[...].astype(f32)
    w1 = w1_ref[...].astype(f32)
    if d_in <= 8:
        h = x[:, 0:1] * w1[0:1, :] + b1_ref[...].astype(f32)
        for k in range(1, d_in):
            h = h + x[:, k:k + 1] * w1[k:k + 1, :]
    else:
        h = jnp.dot(x.astype(matmul_dtype), w1.astype(matmul_dtype),
                    preferred_element_type=f32) + b1_ref[...].astype(f32)
    h = jnp.tanh(h)
    h = e2 + h * d

    # ---- layers 2-4: MXU matmuls, weights pre-cast to matmul_dtype ----------
    def dense_tanh(hh, w_ref, b_ref):
        acc = jnp.dot(hh.astype(matmul_dtype), w_ref[...],
                      preferred_element_type=f32)
        return jnp.tanh(acc + b_ref[...].astype(f32))

    h = dense_tanh(h, w2_ref, b2_ref)
    h = e2 + h * d
    h = dense_tanh(h, w3_ref, b3_ref)
    h = e2 + h * d
    h = dense_tanh(h, w4_ref, b4_ref)            # hidden -> 16
    o_ref[...] = h.astype(o_ref.dtype)


def trunk_net_pallas(x, enc1, enc2, params, *,
                     block_rows=4096, matmul_dtype=jnp.bfloat16,
                     out_dtype=None):
    """Fused trunk_net forward.  x:(N,Din), enc1/enc2:(N,H) -> (N,16)."""
    (w1, b1), (w2, b2), (w3, b3), (w4, b4) = params
    N, d_in = x.shape
    H = w1.shape[1]
    d_out = w4.shape[1]
    out_dtype = x.dtype if out_dtype is None else out_dtype

    # W1 stays f32 (VPU path in the kernel); layers 2-4 cast once for the MXU.
    if matmul_dtype != jnp.float32:
        w2, w3, w4 = (w.astype(matmul_dtype) for w in (w2, w3, w4))

    # Tile choice: block row-count must be a multiple of 8 (it need not divide
    # N -- Pallas masks the ragged last block), large enough to amortize the
    # ~0.35 us grid-step overhead, and small enough that the grid keeps >= 2
    # steps for v7x's two TensorCores when the batch allows it.
    n8 = _round_up(max(N, 1), 8)
    bm = min(block_rows, n8)
    if pl.cdiv(N, bm) < 2 and n8 >= 16:
        bm = _round_up((n8 + 1) // 2, 8)
    grid = (pl.cdiv(N, bm),)

    row_spec = lambda cols: pl.BlockSpec((bm, cols), lambda i: (i, 0))
    # Constant index_map -> block fetched once, stays resident in VMEM.
    resident = lambda r, c: pl.BlockSpec((r, c), lambda i: (0, 0))

    kernel = functools.partial(_trunk_kernel, matmul_dtype=matmul_dtype)

    out = pl.pallas_call(
        kernel,
        out_shape=jax.ShapeDtypeStruct((N, d_out), out_dtype),
        grid_spec=pltpu.PrefetchScalarGridSpec(
            num_scalar_prefetch=0,
            grid=grid,
            in_specs=[
                row_spec(d_in),            # x
                row_spec(H),               # enc1_out
                row_spec(H),               # enc2_out
                resident(d_in, H),         # W1 (f32, VPU path)
                resident(1, H),            # b1
                resident(H, H),            # W2
                resident(1, H),            # b2
                resident(H, H),            # W3
                resident(1, H),            # b3
                resident(H, d_out),        # W4
                resident(1, d_out),        # b4
            ],
            out_specs=row_spec(d_out),
        ),
        compiler_params=pltpu.CompilerParams(
            # batch axis shards across both TensorCores on v7x; free elsewhere.
            dimension_semantics=("parallel",),
            # valid on v7x (64 MiB physical) as well as v5e/v6e.
            vmem_limit_bytes=32 * 1024 * 1024,
        ),
    )(x, enc1, enc2, w1, b1, w2, b2, w3, b3, w4, b4)

    return out


def xavier_uniform(key, fan_in, fan_out, dtype=jnp.float32):
    """Matches torch.nn.init.xavier_uniform_ (gain=1)."""
    limit = (6.0 / (fan_in + fan_out)) ** 0.5
    return jax.random.uniform(key, (fan_in, fan_out), dtype,
                              minval=-limit, maxval=limit)


def init_trunk_params(key, input_dim, hidden_dim=64, out_dim=16):
    k1, k2, k3, k4 = jax.random.split(key, 4)
    return (
        (xavier_uniform(k1, input_dim, hidden_dim),
         jnp.zeros((1, hidden_dim), jnp.float32)),
        (xavier_uniform(k2, hidden_dim, hidden_dim),
         jnp.zeros((1, hidden_dim), jnp.float32)),
        (xavier_uniform(k3, hidden_dim, hidden_dim),
         jnp.zeros((1, hidden_dim), jnp.float32)),
        (xavier_uniform(k4, hidden_dim, out_dim),
         jnp.zeros((1, out_dim), jnp.float32)),
    )


def trunk_net_ref(x, enc1, enc2, params, matmul_dtype=jnp.float32,
                  layer1_f32=False):
    """Pure-JAX reference (mirrors the PyTorch forward)."""
    (w1, b1), (w2, b2), (w3, b3), (w4, b4) = params
    f32 = jnp.float32

    def dense(h, w, b, dt):
        return jnp.tanh(jnp.dot(h.astype(dt), w.astype(dt),
                                preferred_element_type=f32) + b)

    dt1 = f32 if layer1_f32 else matmul_dtype
    h = dense(x, w1, b1, dt1)
    h = h * enc1 + (1.0 - h) * enc2
    h = dense(h, w2, b2, matmul_dtype)
    h = h * enc1 + (1.0 - h) * enc2
    h = dense(h, w3, b3, matmul_dtype)
    h = h * enc1 + (1.0 - h) * enc2
    h = dense(h, w4, b4, matmul_dtype)
    return h


if __name__ == "__main__":
    # Small, deterministic problem: batch=20 (exercises the masked ragged last
    # block), input_dim=4, hidden=32, out=16.
    N, INPUT_DIM, HIDDEN, OUT = 20, 4, 32, 16

    key = jax.random.PRNGKey(0)
    kp, kx, ke1, ke2 = jax.random.split(key, 4)

    params = init_trunk_params(kp, INPUT_DIM, hidden_dim=HIDDEN, out_dim=OUT)
    x = jax.random.normal(kx, (N, INPUT_DIM), jnp.float32)
    enc1 = jax.random.normal(ke1, (N, HIDDEN), jnp.float32)
    enc2 = jax.random.normal(ke2, (N, HIDDEN), jnp.float32)

    out = trunk_net_pallas(x, enc1, enc2, params)
    out = jax.block_until_ready(out)
    assert out.shape == (N, OUT)

    # Tight check vs. a reference that uses the same mixed-precision recipe
    # (layer-1 f32, layers 2-4 bf16 / f32-accum), plus a loose sanity check vs.
    # the full-f32 PyTorch-equivalent forward.
    ref_mixed = trunk_net_ref(x, enc1, enc2, params,
                              matmul_dtype=jnp.bfloat16, layer1_f32=True)
    assert jnp.allclose(out, ref_mixed, atol=2e-3, rtol=2e-3), \
        "mismatch vs mixed-precision reference"
    ref_f32 = trunk_net_ref(x, enc1, enc2, params, matmul_dtype=jnp.float32)
    assert jnp.allclose(out, ref_f32, atol=1e-1), "mismatch vs f32 reference"

    print("KERNEL_OK")
</pallas_src>

<mosaic_0001>
module attributes {stable_mosaic.version = 11 : i64} {
  func.func @_trunk_kernel(%arg0: i32, %arg1: memref<16x4xf32, #tpu.memory_space<vmem>>, %arg2: memref<16x32xf32, #tpu.memory_space<vmem>>, %arg3: memref<16x32xf32, #tpu.memory_space<vmem>>, %arg4: memref<4x32xf32, #tpu.memory_space<vmem>>, %arg5: memref<1x32xf32, #tpu.memory_space<vmem>>, %arg6: memref<32x32xbf16, #tpu.memory_space<vmem>>, %arg7: memref<1x32xf32, #tpu.memory_space<vmem>>, %arg8: memref<32x32xbf16, #tpu.memory_space<vmem>>, %arg9: memref<1x32xf32, #tpu.memory_space<vmem>>, %arg10: memref<32x16xbf16, #tpu.memory_space<vmem>>, %arg11: memref<1x16xf32, #tpu.memory_space<vmem>>, %arg12: memref<16x16xf32, #tpu.memory_space<vmem>>) attributes {dimension_semantics = [#tpu.dimension_semantics<parallel>], iteration_bounds = array<i64: 2>, scalar_prefetch = 0 : i64, scratch_operands = 0 : i64, tpu.core_type = #tpu.core_type<tc>, window_params = [{transform_indices = @transform_0, window_bounds = array<i64: 16, 4>}, {transform_indices = @transform_1, window_bounds = array<i64: 16, 32>}, {transform_indices = @transform_2, window_bounds = array<i64: 16, 32>}, {pipeline_mode = #tpu.pipeline_mode<synchronous>, transform_indices = @transform_3, window_bounds = array<i64: 4, 32>}, {pipeline_mode = #tpu.pipeline_mode<synchronous>, transform_indices = @transform_4, window_bounds = array<i64: 1, 32>}, {pipeline_mode = #tpu.pipeline_mode<synchronous>, transform_indices = @transform_5, window_bounds = array<i64: 32, 32>}, {pipeline_mode = #tpu.pipeline_mode<synchronous>, transform_indices = @transform_6, window_bounds = array<i64: 1, 32>}, {pipeline_mode = #tpu.pipeline_mode<synchronous>, transform_indices = @transform_7, window_bounds = array<i64: 32, 32>}, {pipeline_mode = #tpu.pipeline_mode<synchronous>, transform_indices = @transform_8, window_bounds = array<i64: 1, 32>}, {pipeline_mode = #tpu.pipeline_mode<synchronous>, transform_indices = @transform_9, window_bounds = array<i64: 32, 16>}, {pipeline_mode = #tpu.pipeline_mode<synchronous>, transform_indices = @transform_10, window_bounds = array<i64: 1, 16>}, {transform_indices = @transform_11, window_bounds = array<i64: 16, 16>}]} {
    %c0 = arith.constant 0 : index
    %c0_0 = arith.constant 0 : index
    %0 = vector.load %arg2[%c0, %c0_0] : memref<16x32xf32, #tpu.memory_space<vmem>>, vector<16x32xf32>
    %c0_1 = arith.constant 0 : index
    %c0_2 = arith.constant 0 : index
    %1 = vector.load %arg3[%c0_1, %c0_2] : memref<16x32xf32, #tpu.memory_space<vmem>>, vector<16x32xf32>
    %2 = arith.subf %0, %1 : vector<16x32xf32>
    %c0_3 = arith.constant 0 : index
    %c0_4 = arith.constant 0 : index
    %3 = vector.load %arg1[%c0_3, %c0_4] : memref<16x4xf32, #tpu.memory_space<vmem>>, vector<16x4xf32>
    %c0_5 = arith.constant 0 : index
    %c0_6 = arith.constant 0 : index
    %4 = vector.load %arg4[%c0_5, %c0_6] : memref<4x32xf32, #tpu.memory_space<vmem>>, vector<4x32xf32>
    %5 = vector.extract_strided_slice %3 {offsets = [0, 0], sizes = [16, 1], strides = [1, 1]} : vector<16x4xf32> to vector<16x1xf32>
    %6 = vector.extract_strided_slice %4 {offsets = [0, 0], sizes = [1, 32], strides = [1, 1]} : vector<4x32xf32> to vector<1x32xf32>
    %7 = vector.broadcast %5 : vector<16x1xf32> to vector<16x32xf32>
    %8 = vector.broadcast %6 : vector<1x32xf32> to vector<16x32xf32>
    %9 = arith.mulf %7, %8 : vector<16x32xf32>
    %c0_7 = arith.constant 0 : index
    %c0_8 = arith.constant 0 : index
    %10 = vector.load %arg5[%c0_7, %c0_8] : memref<1x32xf32, #tpu.memory_space<vmem>>, vector<1x32xf32>
    %11 = vector.broadcast %10 : vector<1x32xf32> to vector<16x32xf32>
    %12 = arith.addf %9, %11 : vector<16x32xf32>
    %13 = vector.extract_strided_slice %3 {offsets = [0, 1], sizes = [16, 1], strides = [1, 1]} : vector<16x4xf32> to vector<16x1xf32>
    %14 = vector.extract_strided_slice %4 {offsets = [1, 0], sizes = [1, 32], strides = [1, 1]} : vector<4x32xf32> to vector<1x32xf32>
    %15 = vector.broadcast %13 : vector<16x1xf32> to vector<16x32xf32>
    %16 = vector.broadcast %14 : vector<1x32xf32> to vector<16x32xf32>
    %17 = arith.mulf %15, %16 : vector<16x32xf32>
    %18 = arith.addf %12, %17 : vector<16x32xf32>
    %19 = vector.extract_strided_slice %3 {offsets = [0, 2], sizes = [16, 1], strides = [1, 1]} : vector<16x4xf32> to vector<16x1xf32>
    %20 = vector.extract_strided_slice %4 {offsets = [2, 0], sizes = [1, 32], strides = [1, 1]} : vector<4x32xf32> to vector<1x32xf32>
    %21 = vector.broadcast %19 : vector<16x1xf32> to vector<16x32xf32>
    %22 = vector.broadcast %20 : vector<1x32xf32> to vector<16x32xf32>
    %23 = arith.mulf %21, %22 : vector<16x32xf32>
    %24 = arith.addf %18, %23 : vector<16x32xf32>
    %25 = vector.extract_strided_slice %3 {offsets = [0, 3], sizes = [16, 1], strides = [1, 1]} : vector<16x4xf32> to vector<16x1xf32>
    %26 = vector.extract_strided_slice %4 {offsets = [3, 0], sizes = [1, 32], strides = [1, 1]} : vector<4x32xf32> to vector<1x32xf32>
    %27 = vector.broadcast %25 : vector<16x1xf32> to vector<16x32xf32>
    %28 = vector.broadcast %26 : vector<1x32xf32> to vector<16x32xf32>
    %29 = arith.mulf %27, %28 : vector<16x32xf32>
    %30 = arith.addf %24, %29 : vector<16x32xf32>
    %31 = math.tanh %30 : vector<16x32xf32>
    %32 = arith.mulf %31, %2 : vector<16x32xf32>
    %33 = arith.addf %1, %32 : vector<16x32xf32>
    %34 = arith.truncf %33 : vector<16x32xf32> to vector<16x32xbf16>
    %c0_9 = arith.constant 0 : index
    %c0_10 = arith.constant 0 : index
    %35 = vector.load %arg6[%c0_9, %c0_10] : memref<32x32xbf16, #tpu.memory_space<vmem>>, vector<32x32xbf16>
    %cst = arith.constant dense<0.000000e+00> : vector<16x32xf32>
    %36 = tpu.matmul %34, %35, %cst {dimension_numbers = #tpu.dot_dimension_numbers<[1], [0], [0], [1], [0, 0, 1, 1], [], []>} : vector<16x32xbf16>, vector<32x32xbf16>, vector<16x32xf32> -> vector<16x32xf32>
    %c0_11 = arith.constant 0 : index
    %c0_12 = arith.constant 0 : index
    %37 = vector.load %arg7[%c0_11, %c0_12] : memref<1x32xf32, #tpu.memory_space<vmem>>, vector<1x32xf32>
    %38 = vector.broadcast %37 : vector<1x32xf32> to vector<16x32xf32>
    %39 = arith.addf %36, %38 : vector<16x32xf32>
    %40 = math.tanh %39 : vector<16x32xf32>
    %41 = arith.mulf %40, %2 : vector<16x32xf32>
    %42 = arith.addf %1, %41 : vector<16x32xf32>
    %43 = arith.truncf %42 : vector<16x32xf32> to vector<16x32xbf16>
    %c0_13 = arith.constant 0 : index
    %c0_14 = arith.constant 0 : index
    %44 = vector.load %arg8[%c0_13, %c0_14] : memref<32x32xbf16, #tpu.memory_space<vmem>>, vector<32x32xbf16>
    %cst_15 = arith.constant dense<0.000000e+00> : vector<16x32xf32>
    %45 = tpu.matmul %43, %44, %cst_15 {dimension_numbers = #tpu.dot_dimension_numbers<[1], [0], [0], [1], [0, 0, 1, 1], [], []>} : vector<16x32xbf16>, vector<32x32xbf16>, vector<16x32xf32> -> vector<16x32xf32>
    %c0_16 = arith.constant 0 : index
    %c0_17 = arith.constant 0 : index
    %46 = vector.load %arg9[%c0_16, %c0_17] : memref<1x32xf32, #tpu.memory_space<vmem>>, vector<1x32xf32>
    %47 = vector.broadcast %46 : vector<1x32xf32> to vector<16x32xf32>
    %48 = arith.addf %45, %47 : vector<16x32xf32>
    %49 = math.tanh %48 : vector<16x32xf32>
    %50 = arith.mulf %49, %2 : vector<16x32xf32>
    %51 = arith.addf %1, %50 : vector<16x32xf32>
    %52 = arith.truncf %51 : vector<16x32xf32> to vector<16x32xbf16>
    %c0_18 = arith.constant 0 : index
    %c0_19 = arith.constant 0 : index
    %53 = vector.load %arg10[%c0_18, %c0_19] : memref<32x16xbf16, #tpu.memory_space<vmem>>, vector<32x16xbf16>
    %cst_20 = arith.constant dense<0.000000e+00> : vector<16x16xf32>
    %54 = tpu.matmul %52, %53, %cst_20 {dimension_numbers = #tpu.dot_dimension_numbers<[1], [0], [0], [1], [0, 0, 1, 1], [], []>} : vector<16x32xbf16>, vector<32x16xbf16>, vector<16x16xf32> -> vector<16x16xf32>
    %c0_21 = arith.constant 0 : index
    %c0_22 = arith.constant 0 : index
    %55 = vector.load %arg11[%c0_21, %c0_22] : memref<1x16xf32, #tpu.memory_space<vmem>>, vector<1x16xf32>
    %56 = vector.broadcast %55 : vector<1x16xf32> to vector<16x16xf32>
    %57 = arith.addf %54, %56 : vector<16x16xf32>
    %58 = math.tanh %57 : vector<16x16xf32>
    %c0_23 = arith.constant 0 : index
    %c0_24 = arith.constant 0 : index
    %59 = vector.load %arg12[%c0_23, %c0_24] : memref<16x16xf32, #tpu.memory_space<vmem>>, vector<16x16xf32>
    tpu.vector_store %arg12[%c0_23, %c0_24], %58 {strides = array<i32>} : memref<16x16xf32, #tpu.memory_space<vmem>>, vector<16x16xf32>,
    return
  }
  func.func @transform_0(%arg0: i32) -> (i32, i32) {
    %c0_i32 = arith.constant 0 : i32
    %c0_i32_0 = arith.constant 0 : i32
    return %arg0, %c0_i32 : i32, i32
  }
  func.func @transform_1(%arg0: i32) -> (i32, i32) {
    %c0_i32 = arith.constant 0 : i32
    %c0_i32_0 = arith.constant 0 : i32
    return %arg0, %c0_i32 : i32, i32
  }
  func.func @transform_2(%arg0: i32) -> (i32, i32) {
    %c0_i32 = arith.constant 0 : i32
    %c0_i32_0 = arith.constant 0 : i32
    return %arg0, %c0_i32 : i32, i32
  }
  func.func @transform_3(%arg0: i32) -> (i32, i32) {
    %c0_i32 = arith.constant 0 : i32
    %c0_i32_0 = arith.constant 0 : i32
    %c0_i32_1 = arith.constant 0 : i32
    return %c0_i32, %c0_i32_0 : i32, i32
  }
  func.func @transform_4(%arg0: i32) -> (i32, i32) {
    %c0_i32 = arith.constant 0 : i32
    %c0_i32_0 = arith.constant 0 : i32
    %c0_i32_1 = arith.constant 0 : i32
    return %c0_i32, %c0_i32_0 : i32, i32
  }
  func.func @transform_5(%arg0: i32) -> (i32, i32) {
    %c0_i32 = arith.constant 0 : i32
    %c0_i32_0 = arith.constant 0 : i32
    %c0_i32_1 = arith.constant 0 : i32
    return %c0_i32, %c0_i32_0 : i32, i32
  }
  func.func @transform_6(%arg0: i32) -> (i32, i32) {
    %c0_i32 = arith.constant 0 : i32
    %c0_i32_0 = arith.constant 0 : i32
    %c0_i32_1 = arith.constant 0 : i32
    return %c0_i32, %c0_i32_0 : i32, i32
  }
  func.func @transform_7(%arg0: i32) -> (i32, i32) {
    %c0_i32 = arith.constant 0 : i32
    %c0_i32_0 = arith.constant 0 : i32
    %c0_i32_1 = arith.constant 0 : i32
    return %c0_i32, %c0_i32_0 : i32, i32
  }
  func.func @transform_8(%arg0: i32) -> (i32, i32) {
    %c0_i32 = arith.constant 0 : i32
    %c0_i32_0 = arith.constant 0 : i32
    %c0_i32_1 = arith.constant 0 : i32
    return %c0_i32, %c0_i32_0 : i32, i32
  }
  func.func @transform_9(%arg0: i32) -> (i32, i32) {
    %c0_i32 = arith.constant 0 : i32
    %c0_i32_0 = arith.constant 0 : i32
    %c0_i32_1 = arith.constant 0 : i32
    return %c0_i32, %c0_i32_0 : i32, i32
  }
  func.func @transform_10(%arg0: i32) -> (i32, i32) {
    %c0_i32 = arith.constant 0 : i32
    %c0_i32_0 = arith.constant 0 : i32
    %c0_i32_1 = arith.constant 0 : i32
    return %c0_i32, %c0_i32_0 : i32, i32
  }
  func.func @transform_11(%arg0: i32) -> (i32, i32) {
    %c0_i32 = arith.constant 0 : i32
    %c0_i32_0 = arith.constant 0 : i32
    return %arg0, %c0_i32 : i32, i32
  }
}

</mosaic_0001>

<llo_original>
// kernel: tpu_custom_call.1
$region0: #{tpu_custom_call.1}
  #allocation0 [shape = 'u32[]', space=smem, size = 0x4, offset = 0x4, fixed_abs, tag = 'smem constant byte address 0x4 - core index']
  #allocation1 [shape = 'u32[144,128]{1,0:T(1,128)}', space=vmem, size = 0x12000, scoped, tag = 'internal scratch']
  %s0 = inlined_call_operand.vmem [shape: f32[20,4], index: 0, kind: input, shape index: {}]
  %s1 = inlined_call_operand.vmem [shape: f32[20,32], index: 1, kind: input, shape index: {}]
  %s2 = inlined_call_operand.vmem [shape: f32[20,32], index: 2, kind: input, shape index: {}]
  %s3 = inlined_call_operand.hbm [shape: f32[4,32], index: 3, kind: input, shape index: {}]
  %s4 = inlined_call_operand.hbm [shape: f32[1,32], index: 4, kind: input, shape index: {}]
  %s5 = inlined_call_operand.hbm [shape: bf16[32,32], index: 5, kind: input, shape index: {}]
  %s6 = inlined_call_operand.hbm [shape: f32[1,32], index: 6, kind: input, shape index: {}]
  %s7 = inlined_call_operand.vmem [shape: bf16[32,32], index: 7, kind: input, shape index: {}]
  %s8 = inlined_call_operand.vmem [shape: f32[1,32], index: 8, kind: input, shape index: {}]
  %s9 = inlined_call_operand.vmem [shape: bf16[32,16], index: 9, kind: input, shape index: {}]
  %s10 = inlined_call_operand.vmem [shape: f32[1,16], index: 10, kind: input, shape index: {}]
  %s11 = inlined_call_operand.vmem [shape: f32[20,16], index: 11, kind: output, shape index: {}]
  %s12 = sld [smem:[#allocation0]]
  $region141: #{tpu_custom_call.1} parent=0
    _
  %s14 = ssub.s32 1, %s12
  %s15 = scalar_select 0, %s14, %s12
  $region1: #{tpu_custom_call.1} parent=0
    #allocation2 [shape = 'u8[2048]{0}', space=vmem, size = 0x800, scoped, tag = 'input window, operand 3, single buffered']
    #allocation3 [shape = 's32[2]{0}', space=sflag, size = 0x8, scoped, tag = 'scoped memory for tpu_custom_call.1']
    #allocation4 [shape = 'u8[512]{0}', space=vmem, size = 0x400, scoped, tag = 'input window, operand 4, single buffered']
    #allocation5 [shape = 's32[1]{0}', space=sflag, size = 0x4, scoped, tag = 'scoped memory for tpu_custom_call.1']
    #allocation6 [shape = 'u8[8192]{0}', space=vmem, size = 0x2000, scoped, tag = 'input window, operand 5, single buffered']
    #allocation7 [shape = 'u8[512]{0}', space=vmem, size = 0x400, scoped, tag = 'input window, operand 6, single buffered']
    #allocation8 [shape = 's32[1]{0}', space=sflag, size = 0x4, scoped, tag = 'scoped memory for tpu_custom_call.1']
    #allocation9 [shape = 'u8[16384]{0}', space=vmem, size = 0x4000, scoped, tag = 'output window, operand 0']
    %16 = vsyncpa [#allocation3], 0
    %17 = vsyncpa [#allocation5], 0
    %18 = vsyncpa [#allocation8], 0
    loop: start=0, step=1, limit=4
    $region2: #{tpu_custom_call.1} parent=1 // loop_pre_header
      _
    $region3: #{tpu_custom_call.1} parent=1 // loop_header
      %s20 = sphi 0, %s24
      %p21 = scmp.ge.s32.totalorder %s20, 4
      %s30 = sphi 0, %s32
      %s33 = sphi 0, %s30
      %s34 = sphi 0, %s33
      %s50 = sphi 0, %s34
      %s56 = sphi 0, %s58
      %s59 = sphi 0, %s56
      %s60 = sphi 0, %s59
      %s76 = sphi 0, %s60
      %s82 = sphi 0, %s84
      %s85 = sphi 0, %s82
      %s86 = sphi 0, %s85
      %s102 = sphi 0, %s86
      %s106 = sphi 0, %s106
      %s108 = sphi 0, %s106
      %s109 = sphi 0, %s108
      %s123 = sphi 0, %s109
      %s127 = sphi 0, %s127
      %s129 = sphi 0, %s127
      %s130 = sphi 0, %s129
      %s144 = sphi 0, %s130
      %s148 = sphi 0, %s148
      %s150 = sphi 0, %s148
      %s151 = sphi 0, %s150
      %s165 = sphi 0, %s151
      %s169 = sphi 0, %s169
      %s171 = sphi 0, %s169
      %s172 = sphi 0, %s171
      %s186 = sphi 0, %s172
      %s190 = sphi 0, %s190
      %s192 = sphi 0, %s190
      %s193 = sphi 0, %s192
      %s207 = sphi 0, %s193
      %s211 = sphi 0, %s211
      %s213 = sphi 0, %s211
      %s214 = sphi 0, %s213
      %s228 = sphi 0, %s214
      %s232 = sphi 0, %s232
      %s234 = sphi 0, %s232
      %s235 = sphi 0, %s234
      %s249 = sphi 0, %s235
      %s253 = sphi 0, %s253
      %s255 = sphi 0, %s253
      %s256 = sphi 0, %s255
      %s270 = sphi 0, %s256
      %s276 = sphi 0, %s278
      %s279 = sphi 0, %s276
      %s280 = sphi 0, %s279
      %s296 = sphi 0, %s280
    $region4: #{tpu_custom_call.1} parent=1 // loop_header_branch
      %23 = sbr.rel (%p21) target = $region8
    $region5: #{tpu_custom_call.1} parent=1 // loop_body
      %s25 = ssub.s32 %s20, 1
      %s26 = ssub.s32 %s20, 2
      %s27 = sadd.s32 %s20, 1
      %s28 = ssub.s32 %s20, %s27
      %p29 = scmp.eq.s32.totalorder %s28, 0
      %s31 = sadd.s32 %s30, 1
      %s32 = scalar_select %p29, %s30, %s31
      %p35 = pneg %p29
      %p36 = scmp.eq.s32.totalorder %s20, 1
      %p37 = por %p35, %p36
      %p38 = scmp.ne.s32.totalorder %s30, %s33
      %p39 = scmp.eq.s32.totalorder %s20, 0
      %p40 = por %p38, %p39
      %p41 = scmp.ne.s32.totalorder %s30, %s33
      %p42 = scmp.eq.s32.totalorder %s25, 1
      %p43 = por %p41, %p42
      %p44 = scmp.ne.s32.totalorder %s33, %s34
      %p45 = scmp.eq.s32.totalorder %s25, 0
      %p46 = por %p44, %p45
      %p47 = scmp.ne.s32.totalorder %s33, %s34
      %p48 = scmp.eq.s32.totalorder %s26, 1
      %p49 = por %p47, %p48
      %p51 = scmp.ne.s32.totalorder %s34, %s50
      %p52 = scmp.eq.s32.totalorder %s26, 0
      %p53 = por %p51, %p52
      %s54 = ssub.s32 %s20, %s27
      %p55 = scmp.eq.s32.totalorder %s54, 0
      %s57 = sadd.s32 %s56, 1
      %s58 = scalar_select %p55, %s56, %s57
      %p61 = pneg %p55
      %p62 = scmp.eq.s32.totalorder %s20, 1
      %p63 = por %p61, %p62
      %p64 = scmp.ne.s32.totalorder %s56, %s59
      %p65 = scmp.eq.s32.totalorder %s20, 0
      %p66 = por %p64, %p65
      %p67 = scmp.ne.s32.totalorder %s56, %s59
      %p68 = scmp.eq.s32.totalorder %s25, 1
      %p69 = por %p67, %p68
      %p70 = scmp.ne.s32.totalorder %s59, %s60
      %p71 = scmp.eq.s32.totalorder %s25, 0
      %p72 = por %p70, %p71
      %p73 = scmp.ne.s32.totalorder %s59, %s60
      %p74 = scmp.eq.s32.totalorder %s26, 1
      %p75 = por %p73, %p74
      %p77 = scmp.ne.s32.totalorder %s60, %s76
      %p78 = scmp.eq.s32.totalorder %s26, 0
      %p79 = por %p77, %p78
      %s80 = ssub.s32 %s20, %s27
      %p81 = scmp.eq.s32.totalorder %s80, 0
      %s83 = sadd.s32 %s82, 1
      %s84 = scalar_select %p81, %s82, %s83
      %p87 = pneg %p81
      %p88 = scmp.eq.s32.totalorder %s20, 1
      %p89 = por %p87, %p88
      %p90 = scmp.ne.s32.totalorder %s82, %s85
      %p91 = scmp.eq.s32.totalorder %s20, 0
      %p92 = por %p90, %p91
      %p93 = scmp.ne.s32.totalorder %s82, %s85
      %p94 = scmp.eq.s32.totalorder %s25, 1
      %p95 = por %p93, %p94
      %p96 = scmp.ne.s32.totalorder %s85, %s86
      %p97 = scmp.eq.s32.totalorder %s25, 0
      %p98 = por %p96, %p97
      %p99 = scmp.ne.s32.totalorder %s85, %s86
      %p100 = scmp.eq.s32.totalorder %s26, 1
      %p101 = por %p99, %p100
      %p103 = scmp.ne.s32.totalorder %s86, %s102
      %p104 = scmp.eq.s32.totalorder %s26, 0
      %p105 = por %p103, %p104
      %s107 = sadd.s32 %s106, 1
      %p110 = scmp.eq.s32.totalorder %s20, 1
      %p111 = scmp.ne.s32.totalorder %s106, %s108
      %p112 = scmp.eq.s32.totalorder %s20, 0
      %p113 = por %p111, %p112
      %p114 = scmp.ne.s32.totalorder %s106, %s108
      %p115 = scmp.eq.s32.totalorder %s25, 1
      %p116 = por %p114, %p115
      %p117 = scmp.ne.s32.totalorder %s108, %s109
      %p118 = scmp.eq.s32.totalorder %s25, 0
      %p119 = por %p117, %p118
      %p120 = scmp.ne.s32.totalorder %s108, %s109
      %p121 = scmp.eq.s32.totalorder %s26, 1
      %p122 = por %p120, %p121
      %p124 = scmp.ne.s32.totalorder %s109, %s123
      %p125 = scmp.eq.s32.totalorder %s26, 0
      %p126 = por %p124, %p125
      %s128 = sadd.s32 %s127, 1
      %p131 = scmp.eq.s32.totalorder %s20, 1
      %p132 = scmp.ne.s32.totalorder %s127, %s129
      %p133 = scmp.eq.s32.totalorder %s20, 0
      %p134 = por %p132, %p133
      %p135 = scmp.ne.s32.totalorder %s127, %s129
      %p136 = scmp.eq.s32.totalorder %s25, 1
      %p137 = por %p135, %p136
      %p138 = scmp.ne.s32.totalorder %s129, %s130
      %p139 = scmp.eq.s32.totalorder %s25, 0
      %p140 = por %p138, %p139
      %p141 = scmp.ne.s32.totalorder %s129, %s130
      %p142 = scmp.eq.s32.totalorder %s26, 1
      %p143 = por %p141, %p142
      %p145 = scmp.ne.s32.totalorder %s130, %s144
      %p146 = scmp.eq.s32.totalorder %s26, 0
      %p147 = por %p145, %p146
      %s149 = sadd.s32 %s148, 1
      %p152 = scmp.eq.s32.totalorder %s20, 1
      %p153 = scmp.ne.s32.totalorder %s148, %s150
      %p154 = scmp.eq.s32.totalorder %s20, 0
      %p155 = por %p153, %p154
      %p156 = scmp.ne.s32.totalorder %s148, %s150
      %p157 = scmp.eq.s32.totalorder %s25, 1
      %p158 = por %p156, %p157
      %p159 = scmp.ne.s32.totalorder %s150, %s151
      %p160 = scmp.eq.s32.totalorder %s25, 0
      %p161 = por %p159, %p160
      %p162 = scmp.ne.s32.totalorder %s150, %s151
      %p163 = scmp.eq.s32.totalorder %s26, 1
      %p164 = por %p162, %p163
      %p166 = scmp.ne.s32.totalorder %s151, %s165
      %p167 = scmp.eq.s32.totalorder %s26, 0
      %p168 = por %p166, %p167
      %s170 = sadd.s32 %s169, 1
      %p173 = scmp.eq.s32.totalorder %s20, 1
      %p174 = scmp.ne.s32.totalorder %s169, %s171
      %p175 = scmp.eq.s32.totalorder %s20, 0
      %p176 = por %p174, %p175
      %p177 = scmp.ne.s32.totalorder %s169, %s171
      %p178 = scmp.eq.s32.totalorder %s25, 1
      %p179 = por %p177, %p178
      %p180 = scmp.ne.s32.totalorder %s171, %s172
      %p181 = scmp.eq.s32.totalorder %s25, 0
      %p182 = por %p180, %p181
      %p183 = scmp.ne.s32.totalorder %s171, %s172
      %p184 = scmp.eq.s32.totalorder %s26, 1
      %p185 = por %p183, %p184
      %p187 = scmp.ne.s32.totalorder %s172, %s186
      %p188 = scmp.eq.s32.totalorder %s26, 0
      %p189 = por %p187, %p188
      %s191 = sadd.s32 %s190, 1
      %p194 = scmp.eq.s32.totalorder %s20, 1
      %p195 = scmp.ne.s32.totalorder %s190, %s192
      %p196 = scmp.eq.s32.totalorder %s20, 0
      %p197 = por %p195, %p196
      %p198 = scmp.ne.s32.totalorder %s190, %s192
      %p199 = scmp.eq.s32.totalorder %s25, 1
      %p200 = por %p198, %p199
      %p201 = scmp.ne.s32.totalorder %s192, %s193
      %p202 = scmp.eq.s32.totalorder %s25, 0
      %p203 = por %p201, %p202
      %p204 = scmp.ne.s32.totalorder %s192, %s193
      %p205 = scmp.eq.s32.totalorder %s26, 1
      %p206 = por %p204, %p205
      %p208 = scmp.ne.s32.totalorder %s193, %s207
      %p209 = scmp.eq.s32.totalorder %s26, 0
      %p210 = por %p208, %p209
      %s212 = sadd.s32 %s211, 1
      %p215 = scmp.eq.s32.totalorder %s20, 1
      %p216 = scmp.ne.s32.totalorder %s211, %s213
      %p217 = scmp.eq.s32.totalorder %s20, 0
      %p218 = por %p216, %p217
      %p219 = scmp.ne.s32.totalorder %s211, %s213
      %p220 = scmp.eq.s32.totalorder %s25, 1
      %p221 = por %p219, %p220
      %p222 = scmp.ne.s32.totalorder %s213, %s214
      %p223 = scmp.eq.s32.totalorder %s25, 0
      %p224 = por %p222, %p223
      %p225 = scmp.ne.s32.totalorder %s213, %s214
      %p226 = scmp.eq.s32.totalorder %s26, 1
      %p227 = por %p225, %p226
      %p229 = scmp.ne.s32.totalorder %s214, %s228
      %p230 = scmp.eq.s32.totalorder %s26, 0
      %p231 = por %p229, %p230
      %s233 = sadd.s32 %s232, 1
      %p236 = scmp.eq.s32.totalorder %s20, 1
      %p237 = scmp.ne.s32.totalorder %s232, %s234
      %p238 = scmp.eq.s32.totalorder %s20, 0
      %p239 = por %p237, %p238
      %p240 = scmp.ne.s32.totalorder %s232, %s234
      %p241 = scmp.eq.s32.totalorder %s25, 1
      %p242 = por %p240, %p241
      %p243 = scmp.ne.s32.totalorder %s234, %s235
      %p244 = scmp.eq.s32.totalorder %s25, 0
      %p245 = por %p243, %p244
      %p246 = scmp.ne.s32.totalorder %s234, %s235
      %p247 = scmp.eq.s32.totalorder %s26, 1
      %p248 = por %p246, %p247
      %p250 = scmp.ne.s32.totalorder %s235, %s249
      %p251 = scmp.eq.s32.totalorder %s26, 0
      %p252 = por %p250, %p251
      %s254 = sadd.s32 %s253, 1
      %p257 = scmp.eq.s32.totalorder %s20, 1
      %p258 = scmp.ne.s32.totalorder %s253, %s255
      %p259 = scmp.eq.s32.totalorder %s20, 0
      %p260 = por %p258, %p259
      %p261 = scmp.ne.s32.totalorder %s253, %s255
      %p262 = scmp.eq.s32.totalorder %s25, 1
      %p263 = por %p261, %p262
      %p264 = scmp.ne.s32.totalorder %s255, %s256
      %p265 = scmp.eq.s32.totalorder %s25, 0
      %p266 = por %p264, %p265
      %p267 = scmp.ne.s32.totalorder %s255, %s256
      %p268 = scmp.eq.s32.totalorder %s26, 1
      %p269 = por %p267, %p268
      %p271 = scmp.ne.s32.totalorder %s256, %s270
      %p272 = scmp.eq.s32.totalorder %s26, 0
      %p273 = por %p271, %p272
      %s274 = ssub.s32 %s20, %s27
      %p275 = scmp.eq.s32.totalorder %s274, 0
      %s277 = sadd.s32 %s276, 1
      %s278 = scalar_select %p275, %s276, %s277
      %p281 = pneg %p275
      %p282 = scmp.eq.s32.totalorder %s20, 1
      %p283 = por %p281, %p282
      %p284 = scmp.ne.s32.totalorder %s276, %s279
      %p285 = scmp.eq.s32.totalorder %s20, 0
      %p286 = por %p284, %p285
      %p287 = scmp.ne.s32.totalorder %s276, %s279
      %p288 = scmp.eq.s32.totalorder %s25, 1
      %p289 = por %p287, %p288
      %p290 = scmp.ne.s32.totalorder %s279, %s280
      %p291 = scmp.eq.s32.totalorder %s25, 0
      %p292 = por %p290, %p291
      %p293 = scmp.ne.s32.totalorder %s279, %s280
      %p294 = scmp.eq.s32.totalorder %s26, 1
      %p295 = por %p293, %p294
      %p297 = scmp.ne.s32.totalorder %s280, %s296
      %p298 = scmp.eq.s32.totalorder %s26, 0
      %p299 = por %p297, %p298
      %p300 = scmp.le.s32.totalorder 1, %s20
      %p301 = scmp.lt.s32.totalorder %s20, 3
      %p302 = pnand %p300, %p301
      %p303 = pneg %p302
      // Predicated region
      $region9: #{tpu_custom_call.1} parent=5 // pred_check
        _
      $region10: #{tpu_custom_call.1} parent=5 // pred_check_branch
        %305 = sbr.rel (%p302) target = $region12
      $region11: #{tpu_custom_call.1} parent=5 // pred_region
        %s306 = ssub.s32 %s20, 1
        // Predicated region
        $region13: #{tpu_custom_call.1} parent=11 // pred_check
          %p307 = pneg %p119
        $region14: #{tpu_custom_call.1} parent=11 // pred_check_branch
          %309 = sbr.rel (%p307) target = $region16
        $region15: #{tpu_custom_call.1} parent=11 // pred_region
          %s311 = ssub.s32 64, 64
          %312 = vsyncadd [#allocation3], %s311
          %s314 = sshll.u32 [#allocation2], 4
          %s315 = int_to_ptr.vmem [resolvable:$true] %s314
          %317 = dma.hbm_to_vmem [thread:$0]  %s3, 64, %s315, [#allocation3]
        $region16: #{tpu_custom_call.1} parent=11 // pred_fallthru
          _
        // Predicated region
        $region17: #{tpu_custom_call.1} parent=11 // pred_check
          %p318 = pneg %p140
        $region18: #{tpu_custom_call.1} parent=11 // pred_check_branch
          %320 = sbr.rel (%p318) target = $region20
        $region19: #{tpu_custom_call.1} parent=11 // pred_region
          %s322 = ssub.s32 16, 16
          %323 = vsyncadd [#allocation5], %s322
          %s325 = sshll.u32 [#allocation4], 4
          %s326 = int_to_ptr.vmem [resolvable:$true] %s325
          %328 = dma.hbm_to_vmem [thread:$0]  %s4, 16, %s326, [#allocation5]
        $region20: #{tpu_custom_call.1} parent=11 // pred_fallthru
          _
        // Predicated region
        $region21: #{tpu_custom_call.1} parent=11 // pred_check
          %p329 = pneg %p161
        $region22: #{tpu_custom_call.1} parent=11 // pred_check_branch
          %331 = sbr.rel (%p329) target = $region24
        $region23: #{tpu_custom_call.1} parent=11 // pred_region
          %s333 = ssub.s32 256, 256
          %334 = vsyncadd [#allocation5], %s333
          %s335 = sshll.u32 [#allocation6], 4
          %s336 = int_to_ptr.vmem [resolvable:$true] %s335
          %341 = dma.hbm_to_vmem [thread:$0]  %s5, 256, %s336, [#allocation5], 64, 64, 4
        $region24: #{tpu_custom_call.1} parent=11 // pred_fallthru
          _
        // Predicated region
        $region25: #{tpu_custom_call.1} parent=11 // pred_check
          %p342 = pneg %p182
        $region26: #{tpu_custom_call.1} parent=11 // pred_check_branch
          %344 = sbr.rel (%p342) target = $region28
        $region27: #{tpu_custom_call.1} parent=11 // pred_region
          %s346 = ssub.s32 16, 16
          %347 = vsyncadd [#allocation8], %s346
          %s349 = sshll.u32 [#allocation7], 4
          %s350 = int_to_ptr.vmem [resolvable:$true] %s349
          %352 = dma.hbm_to_vmem [thread:$0]  %s6, 16, %s350, [#allocation8]
        $region28: #{tpu_custom_call.1} parent=11 // pred_fallthru
          _
        // Predicated region
        $region29: #{tpu_custom_call.1} parent=11 // pred_check
          %p353 = pneg %p203
        $region30: #{tpu_custom_call.1} parent=11 // pred_check_branch
          %355 = sbr.rel (%p353) target = $region32
        $region31: #{tpu_custom_call.1} parent=11 // pred_region
          _
        $region32: #{tpu_custom_call.1} parent=11 // pred_fallthru
          _
        // Predicated region
        $region33: #{tpu_custom_call.1} parent=11 // pred_check
          %p356 = pneg %p224
        $region34: #{tpu_custom_call.1} parent=11 // pred_check_branch
          %358 = sbr.rel (%p356) target = $region36
        $region35: #{tpu_custom_call.1} parent=11 // pred_region
          _
        $region36: #{tpu_custom_call.1} parent=11 // pred_fallthru
          _
        // Predicated region
        $region37: #{tpu_custom_call.1} parent=11 // pred_check
          %p359 = pneg %p245
        $region38: #{tpu_custom_call.1} parent=11 // pred_check_branch
          %361 = sbr.rel (%p359) target = $region40
        $region39: #{tpu_custom_call.1} parent=11 // pred_region
          _
        $region40: #{tpu_custom_call.1} parent=11 // pred_fallthru
          _
        // Predicated region
        $region41: #{tpu_custom_call.1} parent=11 // pred_check
          %p362 = pneg %p266
        $region42: #{tpu_custom_call.1} parent=11 // pred_check_branch
          %364 = sbr.rel (%p362) target = $region44
        $region43: #{tpu_custom_call.1} parent=11 // pred_region
          _
        $region44: #{tpu_custom_call.1} parent=11 // pred_fallthru
          _
      $region12: #{tpu_custom_call.1} parent=5 // pred_fallthru
        _
      %p365 = scmp.lt.s32.totalorder %s20, 2
      // Predicated region
      $region45: #{tpu_custom_call.1} parent=5 // pred_check
        %p366 = pneg %p365
      $region46: #{tpu_custom_call.1} parent=5 // pred_check_branch
        %368 = sbr.rel (%p366) target = $region48
      $region47: #{tpu_custom_call.1} parent=5 // pred_region
        // Predicated region
        $region49: #{tpu_custom_call.1} parent=47 // pred_check
          %p369 = pneg %p40
        $region50: #{tpu_custom_call.1} parent=47 // pred_check_branch
          %371 = sbr.rel (%p369) target = $region52
        $region51: #{tpu_custom_call.1} parent=47 // pred_region
          %s372 = smul.u32 2, %s20
          %s373 = ssub.s32 3, %s372
          %p374 = scmp.lt.s32.totalorder %s373, 2
          %s375 = scalar_select %p374, %s373, 2
          %s376 = smul.u32 128, %s375
          %p377 = scmp.lt.s32.totalorder %s372, 2
          %s378 = scalar_select %p377, %s372, 2
          %s379 = smul.addr %s378, 8
          %s380 = scalar_lea.vmem %s0, %s379
          %s381 = smul.u32 2, %s20
          %s382 = ssub.s32 3, %s381
          %p383 = scmp.lt.s32.totalorder %s382, 2
          %s384 = scalar_select %p383, %s382, 2
          %s385 = smul.u32 128, %s384
        $region52: #{tpu_custom_call.1} parent=47 // pred_fallthru
          _
        // Predicated region
        $region53: #{tpu_custom_call.1} parent=47 // pred_check
          %p386 = pneg %p66
        $region54: #{tpu_custom_call.1} parent=47 // pred_check_branch
          %388 = sbr.rel (%p386) target = $region56
        $region55: #{tpu_custom_call.1} parent=47 // pred_region
          %s389 = smul.u32 2, %s20
          %s390 = ssub.s32 3, %s389
          %p391 = scmp.lt.s32.totalorder %s390, 2
          %s392 = scalar_select %p391, %s390, 2
          %s393 = smul.u32 128, %s392
          %p394 = scmp.lt.s32.totalorder %s389, 2
          %s395 = scalar_select %p394, %s389, 2
          %s396 = smul.addr %s395, 8
          %s397 = scalar_lea.vmem %s1, %s396
          %s398 = smul.u32 2, %s20
          %s399 = ssub.s32 3, %s398
          %p400 = scmp.lt.s32.totalorder %s399, 2
          %s401 = scalar_select %p400, %s399, 2
          %s402 = smul.u32 128, %s401
        $region56: #{tpu_custom_call.1} parent=47 // pred_fallthru
          _
        // Predicated region
        $region57: #{tpu_custom_call.1} parent=47 // pred_check
          %p403 = pneg %p92
        $region58: #{tpu_custom_call.1} parent=47 // pred_check_branch
          %405 = sbr.rel (%p403) target = $region60
        $region59: #{tpu_custom_call.1} parent=47 // pred_region
          %s406 = smul.u32 2, %s20
          %s407 = ssub.s32 3, %s406
          %p408 = scmp.lt.s32.totalorder %s407, 2
          %s409 = scalar_select %p408, %s407, 2
          %s410 = smul.u32 128, %s409
          %p411 = scmp.lt.s32.totalorder %s406, 2
          %s412 = scalar_select %p411, %s406, 2
          %s413 = smul.addr %s412, 8
          %s414 = scalar_lea.vmem %s2, %s413
          %s415 = smul.u32 2, %s20
          %s416 = ssub.s32 3, %s415
          %p417 = scmp.lt.s32.totalorder %s416, 2
          %s418 = scalar_select %p417, %s416, 2
          %s419 = smul.u32 128, %s418
        $region60: #{tpu_custom_call.1} parent=47 // pred_fallthru
          _
      $region48: #{tpu_custom_call.1} parent=5 // pred_fallthru
        _
      %p420 = scmp.le.s32.totalorder 1, %s20
      %p421 = scmp.lt.s32.totalorder %s20, 3
      %p422 = pnand %p420, %p421
      %p423 = pneg %p422
      // Predicated region
      $region61: #{tpu_custom_call.1} parent=5 // pred_check
        _
      $region62: #{tpu_custom_call.1} parent=5 // pred_check_branch
        %425 = sbr.rel (%p422) target = $region64
      $region63: #{tpu_custom_call.1} parent=5 // pred_region
        %s426 = ssub.s32 %s20, 1
        // Predicated region
        $region65: #{tpu_custom_call.1} parent=63 // pred_check
          %p427 = pneg %p119
        $region66: #{tpu_custom_call.1} parent=63 // pred_check_branch
          %429 = sbr.rel (%p427) target = $region68
        $region67: #{tpu_custom_call.1} parent=63 // pred_region
          %430 = dma.done [#allocation3], 64
        $region68: #{tpu_custom_call.1} parent=63 // pred_fallthru
          _
        // Predicated region
        $region69: #{tpu_custom_call.1} parent=63 // pred_check
          %p431 = pneg %p140
        $region70: #{tpu_custom_call.1} parent=63 // pred_check_branch
          %433 = sbr.rel (%p431) target = $region72
        $region71: #{tpu_custom_call.1} parent=63 // pred_region
          %434 = dma.done [#allocation5], 16
        $region72: #{tpu_custom_call.1} parent=63 // pred_fallthru
          _
        // Predicated region
        $region73: #{tpu_custom_call.1} parent=63 // pred_check
          %p435 = pneg %p161
        $region74: #{tpu_custom_call.1} parent=63 // pred_check_branch
          %437 = sbr.rel (%p435) target = $region76
        $region75: #{tpu_custom_call.1} parent=63 // pred_region
          %438 = dma.done [#allocation5], 256
        $region76: #{tpu_custom_call.1} parent=63 // pred_fallthru
          _
        // Predicated region
        $region77: #{tpu_custom_call.1} parent=63 // pred_check
          %p439 = pneg %p182
        $region78: #{tpu_custom_call.1} parent=63 // pred_check_branch
          %441 = sbr.rel (%p439) target = $region80
        $region79: #{tpu_custom_call.1} parent=63 // pred_region
          %442 = dma.done [#allocation8], 16
        $region80: #{tpu_custom_call.1} parent=63 // pred_fallthru
          _
        %s443 = smul.u32 2, %s25
        %s444 = ssub.s32 3, %s443
        %p445 = scmp.lt.s32.totalorder %s444, 2
        %s446 = scalar_select %p445, %s444, 2
        %s447 = smul.u32 128, %s446
        %p448 = scmp.lt.s32.totalorder %s443, 2
        %s449 = scalar_select %p448, %s443, 2
        %s450 = smul.addr %s449, 8
        %s451 = scalar_lea.vmem %s0, %s450
        %p452 = pneg %p46
        %p453 = pneg %p43
        %s454 = smul.u32 2, %s25
        %s455 = ssub.s32 3, %s454
        %p456 = scmp.lt.s32.totalorder %s455, 2
        %s457 = scalar_select %p456, %s455, 2
        %s458 = smul.u32 128, %s457
        %p459 = scmp.lt.s32.totalorder %s454, 2
        %s460 = scalar_select %p459, %s454, 2
        %s461 = smul.addr %s460, 8
        %s462 = scalar_lea.vmem %s1, %s461
        %p463 = pneg %p72
        %p464 = pneg %p69
        %s465 = smul.u32 2, %s25
        %s466 = ssub.s32 3, %s465
        %p467 = scmp.lt.s32.totalorder %s466, 2
        %s468 = scalar_select %p467, %s466, 2
        %s469 = smul.u32 128, %s468
        %p470 = scmp.lt.s32.totalorder %s465, 2
        %s471 = scalar_select %p470, %s465, 2
        %s472 = smul.addr %s471, 8
        %s473 = scalar_lea.vmem %s2, %s472
        %p474 = pneg %p98
        %p475 = pneg %p95
        %p476 = pneg %p119
        %p477 = pneg %p116
        %p478 = pneg %p140
        %p479 = pneg %p137
        %p480 = pneg %p161
        %p481 = pneg %p158
        %p482 = pneg %p182
        %p483 = pneg %p179
        %p484 = pneg %p203
        %p485 = pneg %p200
        %p486 = pneg %p224
        %p487 = pneg %p221
        %p488 = pneg %p245
        %p489 = pneg %p242
        %p490 = pneg %p266
        %p491 = pneg %p263
        %p492 = pneg %p292
        %p493 = pneg %p289
        %s494 = sand.u32 %s279, 1
        %s495 = sand.u32 %s279, 1
        %s496 = smul.addr %s495, 16
        %s497 = scalar_lea.vmem [#allocation9], %s496
        %s498 = smul.u32 2, %s25
        %s499 = ssub.s32 3, %s498
        %p500 = scmp.lt.s32.totalorder %s499, 2
        %s501 = scalar_select %p500, %s499, 2
        %s502 = smul.u32 128, %s501
        %p503 = scmp.lt.s32.totalorder %s498, 2
        %s504 = scalar_select %p503, %s498, 2
        %s505 = smul.addr %s504, 8
        %s506 = scalar_lea.vmem %s0, %s505
        %s507 = smul.u32 2, %s25
        %s508 = ssub.s32 3, %s507
        %p509 = scmp.lt.s32.totalorder %s508, 2
        %s510 = scalar_select %p509, %s508, 2
        %s511 = smul.u32 128, %s510
        %s512 = smul.u32 2, %s25
        %s513 = ssub.s32 3, %s512
        %p514 = scmp.lt.s32.totalorder %s513, 2
        %s515 = scalar_select %p514, %s513, 2
        %s516 = smul.u32 128, %s515
        %p517 = scmp.lt.s32.totalorder %s512, 2
        %s518 = scalar_select %p517, %s512, 2
        %s519 = smul.addr %s518, 8
        %s520 = scalar_lea.vmem %s1, %s519
        %s521 = smul.u32 2, %s25
        %s522 = ssub.s32 3, %s521
        %p523 = scmp.lt.s32.totalorder %s522, 2
        %s524 = scalar_select %p523, %s522, 2
        %s525 = smul.u32 128, %s524
        %s526 = smul.u32 2, %s25
        %s527 = ssub.s32 3, %s526
        %p528 = scmp.lt.s32.totalorder %s527, 2
        %s529 = scalar_select %p528, %s527, 2
        %s530 = smul.u32 128, %s529
        %p531 = scmp.lt.s32.totalorder %s526, 2
        %s532 = scalar_select %p531, %s526, 2
        %s533 = smul.addr %s532, 8
        %s534 = scalar_lea.vmem %s2, %s533
        %s535 = smul.u32 2, %s25
        %s536 = ssub.s32 3, %s535
        %p537 = scmp.lt.s32.totalorder %s536, 2
        %s538 = scalar_select %p537, %s536, 2
        %s539 = smul.u32 128, %s538
        %s540 = smul.u32 2, %s25
        %s541 = ssub.s32 3, %s540
        %p542 = scmp.lt.s32.totalorder %s541, 2
        %s543 = scalar_select %p542, %s541, 2
        %s544 = smul.u32 128, %s543
        %v546 = vld [vmem:[%s520] sm:$0xff]
        %v547 = vld [vmem:[%s520 + $0x8] sm:$0xff]
        %v548 = vld [vmem:[%s534] sm:$0xff]
        %v549 = vld [vmem:[%s534 + $0x8] sm:$0xff]
        %v550 = vsub.f32 %v546, %v548
        %v551 = vsub.f32 %v547, %v549
        %v552 = vld [vmem:[%s506] sm:$0xff]
        %v553 = vld [vmem:[%s506 + $0x8] sm:$0xff]
        %v554 = vld [vmem:[#allocation2] sm:$0xf]
        %556 = vset.pattern.permute.xlu0 0
        %557 = vperm.xlu0 %556, %v552
        %v558 = vpop.permute.xlu0 %557
        %561 = vset.pattern.permute.xlu0 0
        %562 = vperm.xlu0 %561, %v553
        %v563 = vpop.permute.xlu0 %562
        %v565 = vlaneseq
        %v566 = vshrl.u32 %v565, 7
        %v567 = vsub.s32 0, %v566
        %v568 = vrot.slane %v554, %v567
        %v569 = vmul.f32 %v558, %v568
        %v570 = vmul.f32 %v563, %v568
        %v571 = vld [vmem:[#allocation4] sm:$0x1]
        %v573 = vlaneseq
        %v574 = vshrl.u32 %v573, 7
        %v575 = vsub.s32 0, %v574
        %v576 = vrot.slane %v571, %v575
        %v578 = vadd.f32 %v569, %v576
        %v579 = vadd.f32 %v570, %v576
        %580 = vset.pattern.permute.xlu0 1
        %581 = vperm.xlu0 %580, %v552
        %v582 = vpop.permute.xlu0 %581
        %584 = vset.pattern.permute.xlu0 1
        %585 = vperm.xlu0 %584, %v553
        %v586 = vpop.permute.xlu0 %585
        %v588 = vlaneseq
        %v589 = vshrl.u32 %v588, 7
        %v590 = vsub.s32 1, %v589
        %v591 = vrot.slane %v554, %v590
        %v592 = vmul.f32 %v582, %v591
        %v593 = vmul.f32 %v586, %v591
        %v594 = vadd.f32 %v578, %v592
        %v595 = vadd.f32 %v579, %v593
        %596 = vset.pattern.permute.xlu0 2
        %597 = vperm.xlu0 %596, %v552
        %v598 = vpop.permute.xlu0 %597
        %600 = vset.pattern.permute.xlu0 2
        %601 = vperm.xlu0 %600, %v553
        %v602 = vpop.permute.xlu0 %601
        %v604 = vlaneseq
        %v605 = vshrl.u32 %v604, 7
        %v606 = vsub.s32 2, %v605
        %v607 = vrot.slane %v554, %v606
        %v608 = vmul.f32 %v598, %v607
        %v609 = vmul.f32 %v602, %v607
        %v610 = vadd.f32 %v594, %v608
        %v611 = vadd.f32 %v595, %v609
        %612 = vset.pattern.permute.xlu0 3
        %613 = vperm.xlu0 %612, %v552
        %v614 = vpop.permute.xlu0 %613
        %616 = vset.pattern.permute.xlu0 3
        %617 = vperm.xlu0 %616, %v553
        %v618 = vpop.permute.xlu0 %617
        %v620 = vlaneseq
        %v621 = vshrl.u32 %v620, 7
        %v622 = vsub.s32 3, %v621
        %v623 = vrot.slane %v554, %v622
        %v624 = vmul.f32 %v614, %v623
        %v625 = vmul.f32 %v618, %v623
        %v626 = vadd.f32 %v610, %v624
        %v627 = vadd.f32 %v611, %v625
        %v628 = vtanh.pop %v626
        %v629 = vtanh.pop %v627
        %v630 = vmul.f32 %v628, %v550
        %v631 = vmul.f32 %v629, %v551
        %v632 = vadd.f32 %v548, %v630
        %v633 = vadd.f32 %v549, %v631
        %v634 = vpack.c.bf16 %v633, %v632
        %v635 = vld [vmem:[#allocation6] sm:$0xf]
        %v636 = vld [vmem:[#allocation6 + $0x4] sm:$0xf]
        %v637 = vld [vmem:[#allocation6 + $0x8] sm:$0xf]
        %v638 = vld [vmem:[#allocation6 + $0xc] sm:$0xf]
        %v639 = vld [vmem:[#allocation7] sm:$0x1]
        %v641 = vlaneseq
        %v642 = vshrl.u32 %v641, 7
        %v643 = vsub.s32 0, %v642
        %v644 = vrot.slane %v639, %v643
        %v650 = vunpack.c.l.b16 %v635
        %v651 = vunpack.c.l.b16 %v636
        %v652 = vunpack.c.l.b16 %v637
        %v653 = vunpack.c.l.b16 %v638
        %v654 = vpack.c.b16 %v651, %v650
        %v655 = vpack.c.b16 %v653, %v652
        %vm658 = vcmask 261120
        %v660 = vsel %vm658, %v634, 0
        %662 = vmatprep.subr.bf16.mxu0 0
        %663 = vmatpush1.bf16.msra.mxu0 0
        %664 = vmatprep.subr.bf16.mxu0 0
        %665 = vmatpush1.bf16.msra.mxu0 0
        %666 = vmatprep.subr.bf16.mxu0 0
        %667 = vmatpush1.bf16.msra.mxu0 0
        %668 = vmatprep.subr.bf16.mxu0 0
        %669 = vmatpush1.bf16.msra.mxu0 0
        %670 = vmatprep.subr.bf16.mxu0 0
        %671 = vmatpush1.bf16.msra.mxu0 0
        %672 = vmatprep.subr.bf16.mxu0 0
        %673 = vmatpush1.bf16.msra.mxu0 0
        %674 = vmatprep.subr.bf16.mxu0 0
        %675 = vmatpush1.bf16.msra.mxu0 %v655
        %676 = vmatprep.subr.bf16.mxu0 0
        %677 = vmatpush1.bf16.msra.mxu0 %v654
        %678 = vmatprep.subr.bf16.mxu0 0
        %679 = vmatpush2.bf16.msra.mxu0 0
        %680 = vmatprep.subr.bf16.mxu0 0
        %681 = vmatpush2.bf16.msra.mxu0 0
        %682 = vmatprep.subr.bf16.mxu0 0
        %683 = vmatpush2.bf16.msra.mxu0 0
        %684 = vmatprep.subr.bf16.mxu0 0
        %685 = vmatpush2.bf16.msra.mxu0 0
        %686 = vmatprep.subr.bf16.mxu0 0
        %687 = vmatpush2.bf16.msra.mxu0 0
        %688 = vmatprep.subr.bf16.mxu0 0
        %689 = vmatpush2.bf16.msra.mxu0 0
        %690 = vmatprep.subr.bf16.mxu0 0
        %691 = vmatpush2.bf16.msra.mxu0 0
        %692 = vmatprep.subr.bf16.mxu0 0
        %693 = vmatpush2.bf16.msra.mxu0 0
        %694 = vmatprep.mubr.bf16.mxu0 0
        %695 = vmatmul.mubr.bf16.gmra.mxu0 %v660
        %v696 = vpop.f32.mrf.mxu0
        %v697 = vadd.f32 %v644, %v696
        %v698 = vpop.f32.mrf.mxu0
        %v699 = vpop.f32.mrf.mxu0
        %v700 = vadd.f32 %v644, %v699
        %v701 = vpop.f32.mrf.mxu0
        %702 = vdwg.mxu0
        %v703 = vtanh.pop %v697
        %v704 = vtanh.pop %v700
        %v705 = vmul.f32 %v703, %v550
        %v706 = vmul.f32 %v704, %v551
        %v707 = vadd.f32 %v548, %v705
        %v708 = vadd.f32 %v549, %v706
        %v709 = vpack.c.bf16 %v708, %v707
        %v710 = vld [vmem:[%s7] sm:$0xf]
        %v711 = vld [vmem:[%s7 + $0x4] sm:$0xf]
        %v712 = vld [vmem:[%s7 + $0x8] sm:$0xf]
        %v713 = vld [vmem:[%s7 + $0xc] sm:$0xf]
        %v714 = vld [vmem:[%s8] sm:$0x1]
        %v716 = vlaneseq
        %v717 = vshrl.u32 %v716, 7
        %v718 = vsub.s32 0, %v717
        %v719 = vrot.slane %v714, %v718
        %v725 = vunpack.c.l.b16 %v710
        %v726 = vunpack.c.l.b16 %v711
        %v727 = vunpack.c.l.b16 %v712
        %v728 = vunpack.c.l.b16 %v713
        %v729 = vpack.c.b16 %v726, %v725
        %v730 = vpack.c.b16 %v728, %v727
        %v734 = vsel %vm658, %v709, 0
        %736 = vmatprep.subr.bf16.mxu0 0
        %737 = vmatpush1.bf16.msra.mxu0 0
        %738 = vmatprep.subr.bf16.mxu0 0
        %739 = vmatpush1.bf16.msra.mxu0 0
        %740 = vmatprep.subr.bf16.mxu0 0
        %741 = vmatpush1.bf16.msra.mxu0 0
        %742 = vmatprep.subr.bf16.mxu0 0
        %743 = vmatpush1.bf16.msra.mxu0 0
        %744 = vmatprep.subr.bf16.mxu0 0
        %745 = vmatpush1.bf16.msra.mxu0 0
        %746 = vmatprep.subr.bf16.mxu0 0
        %747 = vmatpush1.bf16.msra.mxu0 0
        %748 = vmatprep.subr.bf16.mxu0 0
        %749 = vmatpush1.bf16.msra.mxu0 %v730
        %750 = vmatprep.subr.bf16.mxu0 0
        %751 = vmatpush1.bf16.msra.mxu0 %v729
        %752 = vmatprep.subr.bf16.mxu0 0
        %753 = vmatpush2.bf16.msra.mxu0 0
        %754 = vmatprep.subr.bf16.mxu0 0
        %755 = vmatpush2.bf16.msra.mxu0 0
        %756 = vmatprep.subr.bf16.mxu0 0
        %757 = vmatpush2.bf16.msra.mxu0 0
        %758 = vmatprep.subr.bf16.mxu0 0
        %759 = vmatpush2.bf16.msra.mxu0 0
        %760 = vmatprep.subr.bf16.mxu0 0
        %761 = vmatpush2.bf16.msra.mxu0 0
        %762 = vmatprep.subr.bf16.mxu0 0
        %763 = vmatpush2.bf16.msra.mxu0 0
        %764 = vmatprep.subr.bf16.mxu0 0
        %765 = vmatpush2.bf16.msra.mxu0 0
        %766 = vmatprep.subr.bf16.mxu0 0
        %767 = vmatpush2.bf16.msra.mxu0 0
        %768 = vmatprep.mubr.bf16.mxu0 0
        %769 = vmatmul.mubr.bf16.gmra.mxu0 %v734
        %v770 = vpop.f32.mrf.mxu0
        %v771 = vadd.f32 %v719, %v770
        %v772 = vpop.f32.mrf.mxu0
        %v773 = vpop.f32.mrf.mxu0
        %v774 = vadd.f32 %v719, %v773
        %v775 = vpop.f32.mrf.mxu0
        %776 = vdwg.mxu0
        %v777 = vtanh.pop %v771
        %v778 = vtanh.pop %v774
        %v779 = vmul.f32 %v777, %v550
        %v780 = vmul.f32 %v778, %v551
        %v781 = vadd.f32 %v548, %v779
        %v782 = vadd.f32 %v549, %v780
        %v783 = vpack.c.bf16 %v782, %v781
        %v784 = vld [vmem:[%s9] sm:$0xf]
        %v785 = vld [vmem:[%s9 + $0x4] sm:$0xf]
        %v786 = vld [vmem:[%s9 + $0x8] sm:$0xf]
        %v787 = vld [vmem:[%s9 + $0xc] sm:$0xf]
        %v788 = vld [vmem:[%s10] sm:$0x1]
        %v790 = vlaneseq
        %v791 = vshrl.u32 %v790, 7
        %v792 = vsub.s32 0, %v791
        %v793 = vrot.slane %v788, %v792
        %v799 = vunpack.c.l.b16 %v784
        %v800 = vunpack.c.l.b16 %v785
        %v801 = vunpack.c.l.b16 %v786
        %v802 = vunpack.c.l.b16 %v787
        %v803 = vpack.c.b16 %v800, %v799
        %v804 = vpack.c.b16 %v802, %v801
        %v808 = vsel %vm658, %v783, 0
        %810 = vmatprep.subr.bf16.mxu0 0
        %811 = vmatpush1.bf16.msra.mxu0 0
        %812 = vmatprep.subr.bf16.mxu0 0
        %813 = vmatpush1.bf16.msra.mxu0 0
        %814 = vmatprep.subr.bf16.mxu0 0
        %815 = vmatpush1.bf16.msra.mxu0 0
        %816 = vmatprep.subr.bf16.mxu0 0
        %817 = vmatpush1.bf16.msra.mxu0 0
        %818 = vmatprep.subr.bf16.mxu0 0
        %819 = vmatpush1.bf16.msra.mxu0 0
        %820 = vmatprep.subr.bf16.mxu0 0
        %821 = vmatpush1.bf16.msra.mxu0 0
        %822 = vmatprep.subr.bf16.mxu0 0
        %823 = vmatpush1.bf16.msra.mxu0 %v804
        %824 = vmatprep.subr.bf16.mxu0 0
        %825 = vmatpush1.bf16.msra.mxu0 %v803
        %826 = vmatprep.subr.bf16.mxu0 0
        %827 = vmatpush2.bf16.msra.mxu0 0
        %828 = vmatprep.subr.bf16.mxu0 0
        %829 = vmatpush2.bf16.msra.mxu0 0
        %830 = vmatprep.subr.bf16.mxu0 0
        %831 = vmatpush2.bf16.msra.mxu0 0
        %832 = vmatprep.subr.bf16.mxu0 0
        %833 = vmatpush2.bf16.msra.mxu0 0
        %834 = vmatprep.subr.bf16.mxu0 0
        %835 = vmatpush2.bf16.msra.mxu0 0
        %836 = vmatprep.subr.bf16.mxu0 0
        %837 = vmatpush2.bf16.msra.mxu0 0
        %838 = vmatprep.subr.bf16.mxu0 0
        %839 = vmatpush2.bf16.msra.mxu0 0
        %840 = vmatprep.subr.bf16.mxu0 0
        %841 = vmatpush2.bf16.msra.mxu0 0
        %842 = vmatprep.mubr.bf16.mxu0 0
        %843 = vmatmul.mubr.bf16.gmra.mxu0 %v808
        %v844 = vpop.f32.mrf.mxu0
        %v845 = vadd.f32 %v793, %v844
        %v846 = vpop.f32.mrf.mxu0
        %v847 = vpop.f32.mrf.mxu0
        %v848 = vadd.f32 %v793, %v847
        %v849 = vpop.f32.mrf.mxu0
        %850 = vdwg.mxu0
        %v851 = vtanh.pop %v845
        %v852 = vtanh.pop %v848
        %vm853 = vcmask 130048
        %854 = vst.msk [vmem:[%s497] sm:$0xff] %vm853, %v851
        %855 = vst.msk [vmem:[%s497 + $0x8] sm:$0xff] %vm853, %v852
        %s856 = sand.u32 %s279, 1
        %s857 = sand.u32 %s279, 1
        %s858 = smul.addr %s857, 16
        %s859 = scalar_lea.vmem [#allocation9], %s858
        // Predicated region
        $region81: #{tpu_custom_call.1} parent=63 // pred_check
          %p860 = pneg %p289
        $region82: #{tpu_custom_call.1} parent=63 // pred_check_branch
          %862 = sbr.rel (%p860) target = $region84
        $region83: #{tpu_custom_call.1} parent=63 // pred_region
          %s863 = smul.u32 2, %s25
          %s864 = ssub.s32 3, %s863
          %p865 = scmp.lt.s32.totalorder %s864, 2
          %s866 = scalar_select %p865, %s864, 2
          %s867 = smul.u32 128, %s866
          %p868 = scmp.ne.s32.totalorder 0, %s867
          %s869 = smul.addr %s863, 8
          %s870 = scalar_lea.vmem %s11, %s869
          // Predicated region
          $region85: #{tpu_custom_call.1} parent=83 // pred_check
            %p871 = pneg %p868
          $region86: #{tpu_custom_call.1} parent=83 // pred_check_branch
            %873 = sbr.rel (%p871) target = $region88
          $region87: #{tpu_custom_call.1} parent=83 // pred_region
            // Predicated region
            $region89: #{tpu_custom_call.1} parent=87 // pred_check
              _
            $region90: #{tpu_custom_call.1} parent=87 // pred_check_branch
              %875 = sbr.rel (0) target = $region92
            $region91: #{tpu_custom_call.1} parent=87 // pred_region
              // Predicated region
              $region111: #{tpu_custom_call.1} parent=91 // pred_check
                _
              $region112: #{tpu_custom_call.1} parent=91 // pred_check_branch
                %927 = sbr.rel (0) target = $region114
              $region113: #{tpu_custom_call.1} parent=91 // pred_region
                %s928 = sshrl.u32 %s866, 1
                // While loop
                $region115: #{tpu_custom_call.1} parent=113 // loop_pre_header
                  _
                $region116: #{tpu_custom_call.1} parent=113 // loop_header
                  %s930 = sphi 0, %s932
                  %p931 = scmp.ge.s32.totalorder %s930, %s928
                  %s935 = sphi 0, %s944
                  %s936 = sphi %s859, %s947
                  %s937 = sphi %s870, %s948
                $region117: #{tpu_custom_call.1} parent=113 // loop_header_branch
                  %934 = sbr.rel (%p931) target = $region121
                $region118: #{tpu_custom_call.1} parent=113 // loop_body
                  %v938 = vld [vmem:[%s936] sm:$0xff]
                  %939 = vst [vmem:[%s937] sm:$0xff] %v938
                  %v940 = vld [vmem:[%s936 + $0x8] sm:$0xff]
                  %941 = vst [vmem:[%s937 + $0x8] sm:$0xff] %v940
                  %s942 = sadd.s32 1, %s935
                  %p943 = scmp.ge.s32.totalorder %s942, %s928
                  %s944 = scalar_select %p943, 0, %s942
                  %s945 = smul.u32 %s944, 16
                  %s946 = smul.u32 %s944, 16
                  %s947 = scalar_lea.vmem %s859, %s945 [#allocation9]
                  %s948 = scalar_lea.vmem %s870, %s946
                $region119: #{tpu_custom_call.1} parent=113 // loop_footer
                  %s932 = sadd.s32 %s930, 1
                $region120: #{tpu_custom_call.1} parent=113 // loop_footer_branch
                  %929 = sbr.rel target = $region116
                $region121: #{tpu_custom_call.1} parent=113 // loop_exit
                  _
                %s949 = sshrl.u32 %s866, 1
                %s950 = sand.u32 %s866, 1
                %s951 = smul.u32 %s949, 2
                %s952 = smul.u32 8, %s951
                %s953 = scalar_lea.vmem %s859, %s952 [#allocation9]
                %s954 = smul.u32 8, %s951
                %s955 = scalar_lea.vmem %s870, %s954
                // While loop
                $region122: #{tpu_custom_call.1} parent=113 // loop_pre_header
                  _
                $region123: #{tpu_custom_call.1} parent=113 // loop_header
                  %s957 = sphi 0, %s959
                  %p958 = scmp.ge.s32.totalorder %s957, %s950
                  %s962 = sphi 0, %s969
                  %s963 = sphi %s953, %s972
                  %s964 = sphi %s955, %s973
                $region124: #{tpu_custom_call.1} parent=113 // loop_header_branch
                  %961 = sbr.rel (%p958) target = $region128
                $region125: #{tpu_custom_call.1} parent=113 // loop_body
                  %v965 = vld [vmem:[%s963] sm:$0xff]
                  %966 = vst [vmem:[%s964] sm:$0xff] %v965
                  %s967 = sadd.s32 1, %s962
                  %p968 = scmp.ge.s32.totalorder %s967, %s950
                  %s969 = scalar_select %p968, 0, %s967
                  %s970 = smul.u32 %s969, 8
                  %s971 = smul.u32 %s969, 8
                  %s972 = scalar_lea.vmem %s953, %s970 [#allocation9]
                  %s973 = scalar_lea.vmem %s955, %s971
                $region126: #{tpu_custom_call.1} parent=113 // loop_footer
                  %s959 = sadd.s32 %s957, 1
                $region127: #{tpu_custom_call.1} parent=113 // loop_footer_branch
                  %956 = sbr.rel target = $region123
                $region128: #{tpu_custom_call.1} parent=113 // loop_exit
                  _
              $region114: #{tpu_custom_call.1} parent=91 // pred_fallthru
                _
              // Predicated region
              $region129: #{tpu_custom_call.1} parent=91 // pred_check
                _
              $region130: #{tpu_custom_call.1} parent=91 // pred_check_branch
                %975 = sbr.rel target = $region132
              $region131: #{tpu_custom_call.1} parent=91 // pred_region
                _
              $region132: #{tpu_custom_call.1} parent=91 // pred_fallthru
                _
            $region92: #{tpu_custom_call.1} parent=87 // pred_fallthru
              _
            // Predicated region
            $region93: #{tpu_custom_call.1} parent=87 // pred_check
              _
            $region94: #{tpu_custom_call.1} parent=87 // pred_check_branch
              %877 = sbr.rel target = $region96
            $region95: #{tpu_custom_call.1} parent=87 // pred_region
              %s879 = ssub.s32 256, 1
              %s880 = sshrl.u32 %s866, 1
              // While loop
              $region97: #{tpu_custom_call.1} parent=95 // loop_pre_header
                _
              $region98: #{tpu_custom_call.1} parent=95 // loop_header
                %s882 = sphi 0, %s884
                %p883 = scmp.ge.s32.totalorder %s882, %s880
                %s887 = sphi 0, %s896
                %s888 = sphi %s859, %s899
                %s889 = sphi %s870, %s900
              $region99: #{tpu_custom_call.1} parent=95 // loop_header_branch
                %886 = sbr.rel (%p883) target = $region103
              $region100: #{tpu_custom_call.1} parent=95 // loop_body
                %v890 = vld [vmem:[%s888] sm:%s879]
                %891 = vst [vmem:[%s889] sm:%s879] %v890
                %v892 = vld [vmem:[%s888 + $0x8] sm:%s879]
                %893 = vst [vmem:[%s889 + $0x8] sm:%s879] %v892
                %s894 = sadd.s32 1, %s887
                %p895 = scmp.ge.s32.totalorder %s894, %s880
                %s896 = scalar_select %p895, 0, %s894
                %s897 = smul.u32 %s896, 16
                %s898 = smul.u32 %s896, 16
                %s899 = scalar_lea.vmem %s859, %s897 [#allocation9]
                %s900 = scalar_lea.vmem %s870, %s898
              $region101: #{tpu_custom_call.1} parent=95 // loop_footer
                %s884 = sadd.s32 %s882, 1
              $region102: #{tpu_custom_call.1} parent=95 // loop_footer_branch
                %881 = sbr.rel target = $region98
              $region103: #{tpu_custom_call.1} parent=95 // loop_exit
                _
              %s901 = sshrl.u32 %s866, 1
              %s902 = sand.u32 %s866, 1
              %s903 = smul.u32 %s901, 2
              %s904 = smul.u32 8, %s903
              %s905 = scalar_lea.vmem %s859, %s904 [#allocation9]
              %s906 = smul.u32 8, %s903
              %s907 = scalar_lea.vmem %s870, %s906
              // While loop
              $region104: #{tpu_custom_call.1} parent=95 // loop_pre_header
                _
              $region105: #{tpu_custom_call.1} parent=95 // loop_header
                %s909 = sphi 0, %s911
                %p910 = scmp.ge.s32.totalorder %s909, %s902
                %s914 = sphi 0, %s921
                %s915 = sphi %s905, %s924
                %s916 = sphi %s907, %s925
              $region106: #{tpu_custom_call.1} parent=95 // loop_header_branch
                %913 = sbr.rel (%p910) target = $region110
              $region107: #{tpu_custom_call.1} parent=95 // loop_body
                %v917 = vld [vmem:[%s915] sm:%s879]
                %918 = vst [vmem:[%s916] sm:%s879] %v917
                %s919 = sadd.s32 1, %s914
                %p920 = scmp.ge.s32.totalorder %s919, %s902
                %s921 = scalar_select %p920, 0, %s919
                %s922 = smul.u32 %s921, 8
                %s923 = smul.u32 %s921, 8
                %s924 = scalar_lea.vmem %s905, %s922 [#allocation9]
                %s925 = scalar_lea.vmem %s907, %s923
              $region108: #{tpu_custom_call.1} parent=95 // loop_footer
                %s911 = sadd.s32 %s909, 1
              $region109: #{tpu_custom_call.1} parent=95 // loop_footer_branch
                %908 = sbr.rel target = $region105
              $region110: #{tpu_custom_call.1} parent=95 // loop_exit
                _
            $region96: #{tpu_custom_call.1} parent=87 // pred_fallthru
              _
          $region88: #{tpu_custom_call.1} parent=83 // pred_fallthru
            _
          %976 = vnop
        $region84: #{tpu_custom_call.1} parent=63 // pred_fallthru
          _
      $region64: #{tpu_custom_call.1} parent=5 // pred_fallthru
        _
      %p977 = scmp.le.s32.totalorder 2, %s20
      // Predicated region
      $region133: #{tpu_custom_call.1} parent=5 // pred_check
        %p978 = pneg %p977
      $region134: #{tpu_custom_call.1} parent=5 // pred_check_branch
        %980 = sbr.rel (%p978) target = $region136
      $region135: #{tpu_custom_call.1} parent=5 // pred_region
        %s981 = ssub.s32 %s20, 2
        // Predicated region
        $region137: #{tpu_custom_call.1} parent=135 // pred_check
          %p982 = pneg %p295
        $region138: #{tpu_custom_call.1} parent=135 // pred_check_branch
          %984 = sbr.rel (%p982) target = $region140
        $region139: #{tpu_custom_call.1} parent=135 // pred_region
          %s985 = sand.u32 %s280, 1
          %s986 = sand.u32 %s280, 1
          %s987 = smul.addr %s986, 16
          %s988 = scalar_lea.vmem [#allocation9], %s987
        $region140: #{tpu_custom_call.1} parent=135 // pred_fallthru
          _
      $region136: #{tpu_custom_call.1} parent=5 // pred_fallthru
        _
    $region6: #{tpu_custom_call.1} parent=1 // loop_footer
      %s24 = sadd.s32 1, %s20
    $region7: #{tpu_custom_call.1} parent=1 // loop_footer_branch
      %19 = sbr.rel target = $region3
    $region8: #{tpu_custom_call.1} parent=1 // loop_exit
      _
    %989 = vsyncpa [#allocation3], 1
    %s990 = scalar_lea.sflag [#allocation3], 1
    %991 = vsyncpa %s990, 1
    %992 = vsyncpa [#allocation5], 1
    %993 = vsyncpa [#allocation8], 1

</llo_original>
